<compile_context>
chip_gen: v7x
topology: tpu7x:2x2x1
jax: 0.10.0
libtpu: 0.0.40
codegen_flags: <defaults>
</compile_context>

<pallas_src>
import jax
import jax.numpy as jnp
import numpy as np
from jax.experimental import pallas as pl
from jax.experimental.pallas import tpu as pltpu

# Small synthetic shapes consistent with the module.
N, CIN, H, W = 2, 4, 16, 16
COUT = 8
RATES = (6, 12, 18)
PAD = max(RATES)
NHW = N * H * W                     # 512 -> lane axis (4 x 128)
KTAP = 9 * CIN                      # 36 taps*channels per branch
KALL = 3 * KTAP                     # 108 fused contraction dim
EPS = 1e-5


def aspp_kernel(t_ref, wb_ref, bb_ref, wo_ref, bo_ref, out_ref):
    """Single-invocation kernel; everything is tiny and VMEM-resident.

    t_ref : (108, 512)  fused im2col taps, all 3 branches stacked along K
    wb_ref: (24, 108)   block-diagonal branch conv weights (3 x (8,36))
    bb_ref: (24, 1)     stacked branch conv biases
    wo_ref: (8, 24)     1x1 output conv weight
    bo_ref: (8, 1)      1x1 output conv bias
    out   : (8, 512)    lane-dense output (Cout, N*H*W)
    """
    # All three dilated 3x3 convs in ONE MXU pass: (24,108) @ (108,512).
    y = jnp.dot(wb_ref[...], t_ref[...],
                preferred_element_type=jnp.float32)            # (24, 512)
    y = jnp.maximum(y + bb_ref[...], 0.0)                      # bias + ReLU

    # BatchNorm2d (training-mode batch stats, weight=1, bias=0), one pass:
    # per-channel (row) reduction over the 512 lanes.
    inv_n = jnp.float32(1.0 / NHW)
    s = jnp.sum(y, axis=1, keepdims=True)                      # (24, 1)
    ss = jnp.sum(y * y, axis=1, keepdims=True)                 # (24, 1)
    mean = s * inv_n
    var = ss * inv_n - mean * mean                             # biased var
    y = (y - mean) * jax.lax.rsqrt(var + EPS)

    # 1x1 conv over the channel-concat: (8,24) @ (24,512) + bias.
    out_ref[...] = (jnp.dot(wo_ref[...], y,
                            preferred_element_type=jnp.float32)
                    + bo_ref[...])


def _fused_taps(x_nhwc):
    """Zero-padded shifted slices for all 3 dilated 3x3 convs, stacked along
    the contraction axis -> (3*9*CIN, NHW), lane-dense (NHW last)."""
    xp = jnp.pad(x_nhwc, ((0, 0), (PAD, PAD), (PAD, PAD), (0, 0)))
    rows = []
    for rate in RATES:
        for ky in range(3):
            for kx in range(3):
                dy = PAD + (ky - 1) * rate
                dx = PAD + (kx - 1) * rate
                tap = xp[:, dy:dy + H, dx:dx + W, :]            # (N,H,W,CIN)
                rows.append(tap.reshape(NHW, CIN).T)            # (CIN, NHW)
    return jnp.concatenate(rows, axis=0)                        # (108, NHW)


def aspp_forward(x_nchw, params):
    x_nhwc = jnp.transpose(x_nchw.astype(jnp.float32), (0, 2, 3, 1))
    taps = _fused_taps(x_nhwc)                                  # (108, 512)

    # Block-diagonal branch weights: (24, 108); zeros kill cross-branch terms.
    def as_block(w9):                    # (9, CIN, COUT) -> (COUT, 9*CIN)
        return w9.reshape(KTAP, COUT).T
    z = jnp.zeros((COUT, KTAP), jnp.float32)
    wb = jnp.concatenate([
        jnp.concatenate([as_block(params['w1']), z, z], axis=1),
        jnp.concatenate([z, as_block(params['w2']), z], axis=1),
        jnp.concatenate([z, z, as_block(params['w3'])], axis=1),
    ], axis=0)                                                  # (24, 108)
    bb = jnp.concatenate(
        [params['b1'], params['b2'], params['b3']]).reshape(3 * COUT, 1)
    wo = params['wo']                                           # (8, 24)
    bo = params['bo'].reshape(COUT, 1)                          # (8, 1)

    out = pl.pallas_call(
        aspp_kernel,
        out_shape=jax.ShapeDtypeStruct((COUT, NHW), jnp.float32),
        in_specs=[pl.BlockSpec(memory_space=pltpu.MemorySpace.VMEM)] * 5,
        out_specs=pl.BlockSpec(memory_space=pltpu.MemorySpace.VMEM),
    )(taps, wb, bb, wo, bo)                                     # (8, 512)

    out = out.reshape(COUT, N, H, W)
    return jnp.transpose(out, (1, 0, 2, 3))                     # NCHW


def init_params(key):
    """Deterministic init mirroring the module's shapes (kaiming-normal)."""
    ks = jax.random.split(key, 8)
    std3 = np.sqrt(2.0 / (CIN * 9))      # kaiming_normal, fan_in = Cin*3*3
    std1 = np.sqrt(2.0 / (3 * COUT))     # kaiming_normal, fan_in = 3*Cout*1*1
    w1 = std3 * jax.random.normal(ks[0], (9, CIN, COUT), jnp.float32)
    w2 = std3 * jax.random.normal(ks[1], (9, CIN, COUT), jnp.float32)
    w3 = std3 * jax.random.normal(ks[2], (9, CIN, COUT), jnp.float32)
    bb3 = 1.0 / np.sqrt(CIN * 9)         # PyTorch default conv-bias range
    b1 = jax.random.uniform(ks[3], (COUT,), jnp.float32, -bb3, bb3)
    b2 = jax.random.uniform(ks[4], (COUT,), jnp.float32, -bb3, bb3)
    b3 = jax.random.uniform(ks[5], (COUT,), jnp.float32, -bb3, bb3)
    wo = std1 * jax.random.normal(ks[6], (COUT, 3 * COUT), jnp.float32)
    bbo = 1.0 / np.sqrt(3 * COUT)
    bo = jax.random.uniform(ks[7], (COUT,), jnp.float32, -bbo, bbo)
    return dict(w1=w1, b1=b1, w2=w2, b2=b2, w3=w3, b3=b3, wo=wo, bo=bo)


def reference(x_nchw, params):
    """Pure-JAX (XLA conv) reference of the PyTorch forward pass."""
    def branch(x, w9, b, rate):
        w = w9.reshape(3, 3, CIN, COUT).transpose(3, 2, 0, 1)   # OIHW
        y = jax.lax.conv_general_dilated(
            x, w, window_strides=(1, 1),
            padding=[(rate, rate), (rate, rate)],
            rhs_dilation=(rate, rate),
            dimension_numbers=('NCHW', 'OIHW', 'NCHW'))
        y = y + b.reshape(1, COUT, 1, 1)
        y = jnp.maximum(y, 0.0)
        mean = jnp.mean(y, axis=(0, 2, 3), keepdims=True)
        var = jnp.mean((y - mean) ** 2, axis=(0, 2, 3), keepdims=True)
        return (y - mean) * jax.lax.rsqrt(var + EPS)

    y1 = branch(x_nchw, params['w1'], params['b1'], RATES[0])
    y2 = branch(x_nchw, params['w2'], params['b2'], RATES[1])
    y3 = branch(x_nchw, params['w3'], params['b3'], RATES[2])
    cat = jnp.concatenate([y1, y2, y3], axis=1)
    wo = params['wo'].reshape(COUT, 3 * COUT, 1, 1)
    out = jax.lax.conv_general_dilated(
        cat, wo, (1, 1), [(0, 0), (0, 0)],
        dimension_numbers=('NCHW', 'OIHW', 'NCHW'))
    return out + params['bo'].reshape(1, COUT, 1, 1)


if __name__ == "__main__":
    key = jax.random.PRNGKey(0)
    kx, kp = jax.random.split(key)
    x = jax.random.normal(kx, (N, CIN, H, W), jnp.float32)   # NCHW, like PyTorch
    params = init_params(kp)

    out = aspp_forward(x, params)
    out = jax.block_until_ready(out)
    assert out.shape == (N, COUT, H, W)

    ref = reference(x, params)
    np.testing.assert_allclose(np.asarray(out), np.asarray(ref),
                               atol=2e-3, rtol=2e-3)
    print("KERNEL_OK")
</pallas_src>

<mosaic_0001>
module attributes {stable_mosaic.version = 11 : i64} {
  func.func @aspp_kernel(%arg0: memref<108x512xf32, #tpu.memory_space<vmem>>, %arg1: memref<24x108xf32, #tpu.memory_space<vmem>>, %arg2: memref<24x1xf32, #tpu.memory_space<vmem>>, %arg3: memref<8x24xf32, #tpu.memory_space<vmem>>, %arg4: memref<8x1xf32, #tpu.memory_space<vmem>>, %arg5: memref<8x512xf32, #tpu.memory_space<vmem>>) attributes {dimension_semantics = [], scalar_prefetch = 0 : i64, scratch_operands = 0 : i64, tpu.core_type = #tpu.core_type<tc>} {
    %c0 = arith.constant 0 : index
    %c0_0 = arith.constant 0 : index
    %0 = vector.load %arg1[%c0, %c0_0] : memref<24x108xf32, #tpu.memory_space<vmem>>, vector<24x108xf32>
    %c0_1 = arith.constant 0 : index
    %c0_2 = arith.constant 0 : index
    %1 = vector.load %arg0[%c0_1, %c0_2] : memref<108x512xf32, #tpu.memory_space<vmem>>, vector<108x512xf32>
    %cst = arith.constant dense<0.000000e+00> : vector<24x512xf32>
    %2 = tpu.matmul %0, %1, %cst {dimension_numbers = #tpu.dot_dimension_numbers<[1], [0], [0], [1], [0, 0, 1, 1], [], []>} : vector<24x108xf32>, vector<108x512xf32>, vector<24x512xf32> -> vector<24x512xf32>
    %c0_3 = arith.constant 0 : index
    %c0_4 = arith.constant 0 : index
    %3 = vector.load %arg2[%c0_3, %c0_4] : memref<24x1xf32, #tpu.memory_space<vmem>>, vector<24x1xf32>
    %4 = vector.broadcast %3 : vector<24x1xf32> to vector<24x512xf32>
    %5 = arith.addf %2, %4 : vector<24x512xf32>
    %cst_5 = arith.constant 0.000000e+00 : f32
    %6 = vector.broadcast %cst_5 : f32 to vector<24x512xf32>
    %7 = arith.maximumf %5, %6 : vector<24x512xf32>
    %cst_6 = arith.constant dense<0.000000e+00> : vector<24xf32>
    %8 = vector.multi_reduction <add>, %7, %cst_6 [1] : vector<24x512xf32> to vector<24xf32>
    %9 = vector.shape_cast %8 : vector<24xf32> to vector<24x1xf32>
    %10 = arith.mulf %7, %7 : vector<24x512xf32>
    %cst_7 = arith.constant dense<0.000000e+00> : vector<24xf32>
    %11 = vector.multi_reduction <add>, %10, %cst_7 [1] : vector<24x512xf32> to vector<24xf32>
    %12 = vector.shape_cast %11 : vector<24xf32> to vector<24x1xf32>
    %cst_8 = arith.constant 0.001953125 : f32
    %13 = vector.broadcast %cst_8 : f32 to vector<24x1xf32>
    %14 = arith.mulf %9, %13 : vector<24x1xf32>
    %cst_9 = arith.constant 0.001953125 : f32
    %15 = vector.broadcast %cst_9 : f32 to vector<24x1xf32>
    %16 = arith.mulf %12, %15 : vector<24x1xf32>
    %17 = arith.mulf %14, %14 : vector<24x1xf32>
    %18 = arith.subf %16, %17 : vector<24x1xf32>
    %19 = vector.broadcast %14 : vector<24x1xf32> to vector<24x512xf32>
    %20 = arith.subf %7, %19 : vector<24x512xf32>
    %cst_10 = arith.constant 9.99999974E-6 : f32
    %21 = vector.broadcast %cst_10 : f32 to vector<24x1xf32>
    %22 = arith.addf %18, %21 : vector<24x1xf32>
    %23 = math.rsqrt %22 : vector<24x1xf32>
    %24 = vector.broadcast %23 : vector<24x1xf32> to vector<24x512xf32>
    %25 = arith.mulf %20, %24 : vector<24x512xf32>
    %c0_11 = arith.constant 0 : index
    %c0_12 = arith.constant 0 : index
    %26 = vector.load %arg3[%c0_11, %c0_12] : memref<8x24xf32, #tpu.memory_space<vmem>>, vector<8x24xf32>
    %cst_13 = arith.constant dense<0.000000e+00> : vector<8x512xf32>
    %27 = tpu.matmul %26, %25, %cst_13 {dimension_numbers = #tpu.dot_dimension_numbers<[1], [0], [0], [1], [0, 0, 1, 1], [], []>} : vector<8x24xf32>, vector<24x512xf32>, vector<8x512xf32> -> vector<8x512xf32>
    %c0_14 = arith.constant 0 : index
    %c0_15 = arith.constant 0 : index
    %28 = vector.load %arg4[%c0_14, %c0_15] : memref<8x1xf32, #tpu.memory_space<vmem>>, vector<8x1xf32>
    %29 = vector.broadcast %28 : vector<8x1xf32> to vector<8x512xf32>
    %30 = arith.addf %27, %29 : vector<8x512xf32>
    %c0_16 = arith.constant 0 : index
    %c0_17 = arith.constant 0 : index
    %31 = vector.load %arg5[%c0_16, %c0_17] : memref<8x512xf32, #tpu.memory_space<vmem>>, vector<8x512xf32>
    tpu.vector_store %arg5[%c0_16, %c0_17], %30 {strides = array<i32>} : memref<8x512xf32, #tpu.memory_space<vmem>>, vector<8x512xf32>,
    return
  }
}

</mosaic_0001>

<llo_original>
// kernel: tpu_custom_call.1
$region0: #{tpu_custom_call.1}
  #allocation0 [shape = 'u32[]', space=smem, size = 0x4, offset = 0x4, fixed_abs, tag = 'smem constant byte address 0x4 - core index']
  #allocation1 [shape = 'u32[144,128]{1,0:T(1,128)}', space=vmem, size = 0x12000, scoped, tag = 'internal scratch']
  %s0 = inlined_call_operand.hbm [shape: f32[108,512], index: 0, kind: input, shape index: {}]
  %s1 = inlined_call_operand.vmem [shape: f32[24,108], index: 1, kind: input, shape index: {}]
  %s2 = inlined_call_operand.vmem [shape: f32[24,1], index: 2, kind: input, shape index: {}]
  %s3 = inlined_call_operand.vmem [shape: f32[8,24], index: 3, kind: input, shape index: {}]
  %s4 = inlined_call_operand.vmem [shape: f32[8,1], index: 4, kind: input, shape index: {}]
  %s5 = inlined_call_operand.hbm [shape: f32[8,512], index: 5, kind: output, shape index: {}]
  %s6 = sld [smem:[#allocation0]]
  $region34: #{tpu_custom_call.1} parent=0
    _
  %s8 = ssub.s32 1, %s6
  %s9 = scalar_select 0, %s8, %s6
  $region1: #{tpu_custom_call.1} parent=0
    #allocation2 [shape = 'u8[229376]{0}', space=vmem, size = 0x38000, scoped, tag = 'input window, operand 0, single buffered']
    #allocation3 [shape = 's32[1]{0}', space=sflag, size = 0x4, scoped, tag = 'scoped memory for tpu_custom_call.1']
    #allocation4 [shape = 's32[1]{0}', space=sflag, size = 0x4, scoped, tag = 'scoped memory for tpu_custom_call.1']
    #allocation5 [shape = 'u8[16384]{0}', space=vmem, size = 0x4000, scoped, tag = 'output window, operand 0, single buffered']
    %10 = vsyncpa [#allocation3], 0
    %11 = vsyncpa [#allocation4], 0
    // Predicated region
    $region2: #{tpu_custom_call.1} parent=1 // pred_check
      _
    $region3: #{tpu_custom_call.1} parent=1 // pred_check_branch
      %13 = sbr.rel (0) target = $region5
    $region4: #{tpu_custom_call.1} parent=1 // pred_region
      %s15 = ssub.s32 7168, 7168
      %16 = vsyncadd [#allocation3], %s15
      %s17 = sshll.u32 [#allocation2], 4
      %s18 = int_to_ptr.vmem [resolvable:$true] %s17
      %23 = dma.hbm_to_vmem [thread:$0]  %s0, 7168, %s18, [#allocation3], 512, 512, 32
    $region5: #{tpu_custom_call.1} parent=1 // pred_fallthru
      _
    // Predicated region
    $region6: #{tpu_custom_call.1} parent=1 // pred_check
      _
    $region7: #{tpu_custom_call.1} parent=1 // pred_check_branch
      %25 = sbr.rel (0) target = $region9
    $region8: #{tpu_custom_call.1} parent=1 // pred_region
      _
    $region9: #{tpu_custom_call.1} parent=1 // pred_fallthru
      _
    // Predicated region
    $region10: #{tpu_custom_call.1} parent=1 // pred_check
      _
    $region11: #{tpu_custom_call.1} parent=1 // pred_check_branch
      %27 = sbr.rel (0) target = $region13
    $region12: #{tpu_custom_call.1} parent=1 // pred_region
      _
    $region13: #{tpu_custom_call.1} parent=1 // pred_fallthru
      _
    // Predicated region
    $region14: #{tpu_custom_call.1} parent=1 // pred_check
      _
    $region15: #{tpu_custom_call.1} parent=1 // pred_check_branch
      %29 = sbr.rel (0) target = $region17
    $region16: #{tpu_custom_call.1} parent=1 // pred_region
      _
    $region17: #{tpu_custom_call.1} parent=1 // pred_fallthru
      _
    // Predicated region
    $region18: #{tpu_custom_call.1} parent=1 // pred_check
      _
    $region19: #{tpu_custom_call.1} parent=1 // pred_check_branch
      %31 = sbr.rel (0) target = $region21
    $region20: #{tpu_custom_call.1} parent=1 // pred_region
      _
    $region21: #{tpu_custom_call.1} parent=1 // pred_fallthru
      _
    // Predicated region
    $region22: #{tpu_custom_call.1} parent=1 // pred_check
      _
    $region23: #{tpu_custom_call.1} parent=1 // pred_check_branch
      %33 = sbr.rel (0) target = $region25
    $region24: #{tpu_custom_call.1} parent=1 // pred_region
      %34 = dma.done [#allocation3], 7168
    $region25: #{tpu_custom_call.1} parent=1 // pred_fallthru
      _
    %v35 = vld [vmem:[%s1] sm:$0xff]
    %v36 = vld [vmem:[%s1 + $0x8] sm:$0xff]
    %v37 = vld [vmem:[%s1 + $0x10] sm:$0xff]
    %v38 = vld [vmem:[#allocation2] sm:$0xff]
    %v39 = vld [vmem:[#allocation2 + $0x8] sm:$0xff]
    %v40 = vld [vmem:[#allocation2 + $0x10] sm:$0xff]
    %v41 = vld [vmem:[#allocation2 + $0x18] sm:$0xff]
    %v42 = vld [vmem:[#allocation2 + $0x20] sm:$0xff]
    %v43 = vld [vmem:[#allocation2 + $0x28] sm:$0xff]
    %v44 = vld [vmem:[#allocation2 + $0x30] sm:$0xff]
    %v45 = vld [vmem:[#allocation2 + $0x38] sm:$0xff]
    %v46 = vld [vmem:[#allocation2 + $0x40] sm:$0xff]
    %v47 = vld [vmem:[#allocation2 + $0x48] sm:$0xff]
    %v48 = vld [vmem:[#allocation2 + $0x50] sm:$0xff]
    %v49 = vld [vmem:[#allocation2 + $0x58] sm:$0xff]
    %v50 = vld [vmem:[#allocation2 + $0x60] sm:$0xff]
    %v51 = vld [vmem:[#allocation2 + $0x68] sm:$0xff]
    %v52 = vld [vmem:[#allocation2 + $0x70] sm:$0xff]
    %v53 = vld [vmem:[#allocation2 + $0x78] sm:$0xff]
    %v54 = vld [vmem:[#allocation2 + $0x80] sm:$0xff]
    %v55 = vld [vmem:[#allocation2 + $0x88] sm:$0xff]
    %v56 = vld [vmem:[#allocation2 + $0x90] sm:$0xff]
    %v57 = vld [vmem:[#allocation2 + $0x98] sm:$0xff]
    %v58 = vld [vmem:[#allocation2 + $0xa0] sm:$0xff]
    %v59 = vld [vmem:[#allocation2 + $0xa8] sm:$0xff]
    %v60 = vld [vmem:[#allocation2 + $0xb0] sm:$0xff]
    %v61 = vld [vmem:[#allocation2 + $0xb8] sm:$0xff]
    %v62 = vld [vmem:[#allocation2 + $0xc0] sm:$0xff]
    %v63 = vld [vmem:[#allocation2 + $0xc8] sm:$0xff]
    %v64 = vld [vmem:[#allocation2 + $0xd0] sm:$0xff]
    %v65 = vld [vmem:[#allocation2 + $0xd8] sm:$0xff]
    %v66 = vld [vmem:[#allocation2 + $0xe0] sm:$0xff]
    %v67 = vld [vmem:[#allocation2 + $0xe8] sm:$0xff]
    %v68 = vld [vmem:[#allocation2 + $0xf0] sm:$0xff]
    %v69 = vld [vmem:[#allocation2 + $0xf8] sm:$0xff]
    %v70 = vld [vmem:[#allocation2 + $0x100] sm:$0xff]
    %v71 = vld [vmem:[#allocation2 + $0x108] sm:$0xff]
    %v72 = vld [vmem:[#allocation2 + $0x110] sm:$0xff]
    %v73 = vld [vmem:[#allocation2 + $0x118] sm:$0xff]
    %v74 = vld [vmem:[#allocation2 + $0x120] sm:$0xff]
    %v75 = vld [vmem:[#allocation2 + $0x128] sm:$0xff]
    %v76 = vld [vmem:[#allocation2 + $0x130] sm:$0xff]
    %v77 = vld [vmem:[#allocation2 + $0x138] sm:$0xff]
    %v78 = vld [vmem:[#allocation2 + $0x140] sm:$0xff]
    %v79 = vld [vmem:[#allocation2 + $0x148] sm:$0xff]
    %v80 = vld [vmem:[#allocation2 + $0x150] sm:$0xff]
    %v81 = vld [vmem:[#allocation2 + $0x158] sm:$0xff]
    %v82 = vld [vmem:[#allocation2 + $0x160] sm:$0xff]
    %v83 = vld [vmem:[#allocation2 + $0x168] sm:$0xff]
    %v84 = vld [vmem:[#allocation2 + $0x170] sm:$0xff]
    %v85 = vld [vmem:[#allocation2 + $0x178] sm:$0xff]
    %v86 = vld [vmem:[#allocation2 + $0x180] sm:$0xff]
    %v87 = vld [vmem:[#allocation2 + $0x188] sm:$0xff]
    %v88 = vld [vmem:[#allocation2 + $0x190] sm:$0xff]
    %v89 = vld [vmem:[#allocation2 + $0x198] sm:$0xff]
    %v90 = vld [vmem:[#allocation2 + $0x1a0] sm:$0xf]
    %v91 = vld [vmem:[#allocation2 + $0x1a8] sm:$0xf]
    %v92 = vld [vmem:[#allocation2 + $0x1b0] sm:$0xf]
    %v93 = vld [vmem:[#allocation2 + $0x1b8] sm:$0xf]
    %v94 = vld [vmem:[%s2] sm:$0xff]
    %v95 = vld [vmem:[%s2 + $0x8] sm:$0xff]
    %v96 = vld [vmem:[%s2 + $0x10] sm:$0xff]
    %98 = vset.pattern.permute.xlu0 0
    %99 = vperm.xlu0 %98, %v94
    %v100 = vpop.permute.xlu0 %99
    %103 = vset.pattern.permute.xlu0 0
    %104 = vperm.xlu0 %103, %v95
    %v105 = vpop.permute.xlu0 %104
    %108 = vset.pattern.permute.xlu0 0
    %109 = vperm.xlu0 %108, %v96
    %v110 = vpop.permute.xlu0 %109
    %vm112 = vcmask 883712
    %v114 = vsel %vm112, %v35, 0
    %v117 = vsel %vm112, %v36, 0
    %v120 = vsel %vm112, %v37, 0
    %vm122 = vcmask 1043456
    %v124 = vsel %vm122, %v90, 0
    %v127 = vsel %vm122, %v91, 0
    %v130 = vsel %vm122, %v92, 0
    %v133 = vsel %vm122, %v93, 0
    %135 = vmatprep.subr.mxu0 %v39
    %136 = vmatpush1.msra.mxu0 %v38
    %137 = vmatprep.subr.mxu0 %v43
    %138 = vmatpush1.msra.mxu0 %v42
    %139 = vmatprep.subr.mxu0 %v47
    %140 = vmatpush1.msra.mxu0 %v46
    %141 = vmatprep.subr.mxu0 %v51
    %142 = vmatpush1.msra.mxu0 %v50
    %143 = vmatprep.subr.mxu0 %v55
    %144 = vmatpush1.msra.mxu0 %v54
    %145 = vmatprep.subr.mxu0 %v59
    %146 = vmatpush1.msra.mxu0 %v58
    %147 = vmatprep.subr.mxu0 %v63
    %148 = vmatpush1.msra.mxu0 %v62
    %149 = vmatprep.subr.mxu0 %v67
    %150 = vmatpush1.msra.mxu0 %v66
    %151 = vmatprep.subr.mxu0 %v71
    %152 = vmatpush1.msra.mxu0 %v70
    %153 = vmatprep.subr.mxu0 %v75
    %154 = vmatpush1.msra.mxu0 %v74
    %155 = vmatprep.subr.mxu0 %v79
    %156 = vmatpush1.msra.mxu0 %v78
    %157 = vmatprep.subr.mxu0 %v83
    %158 = vmatpush1.msra.mxu0 %v82
    %159 = vmatprep.subr.mxu0 %v87
    %160 = vmatpush1.msra.mxu0 %v86
    %161 = vmatprep.subr.mxu0 %v127
    %162 = vmatpush1.msra.mxu0 %v124
    %163 = vmatprep.subr.mxu0 0.0
    %164 = vmatpush1.msra.mxu0 0.0
    %165 = vmatprep.subr.mxu0 0.0
    %166 = vmatpush1.msra.mxu0 0.0
    %167 = vmatprep.subr.mxu0 0.0
    %168 = vmatpush1.msra.mxu0 0.0
    %169 = vmatprep.subr.mxu0 0.0
    %170 = vmatpush1.msra.mxu0 0.0
    %171 = vmatprep.subr.mxu0 0.0
    %172 = vmatpush1.msra.mxu0 0.0
    %173 = vmatprep.subr.mxu0 0.0
    %174 = vmatpush1.msra.mxu0 0.0
    %175 = vmatprep.subr.mxu0 0.0
    %176 = vmatpush1.msra.mxu0 0.0
    %177 = vmatprep.subr.mxu0 0.0
    %178 = vmatpush1.msra.mxu0 0.0
    %179 = vmatprep.subr.mxu0 0.0
    %180 = vmatpush1.msra.mxu0 0.0
    %181 = vmatprep.subr.mxu0 0.0
    %182 = vmatpush1.msra.mxu0 0.0
    %183 = vmatprep.subr.mxu0 0.0
    %184 = vmatpush1.msra.mxu0 0.0
    %185 = vmatprep.subr.mxu0 0.0
    %186 = vmatpush1.msra.mxu0 0.0
    %187 = vmatprep.subr.mxu0 0.0
    %188 = vmatpush1.msra.mxu0 0.0
    %189 = vmatprep.subr.mxu0 0.0
    %190 = vmatpush1.msra.mxu0 0.0
    %191 = vmatprep.subr.mxu0 0.0
    %192 = vmatpush1.msra.mxu0 0.0
    %193 = vmatprep.subr.mxu0 0.0
    %194 = vmatpush1.msra.mxu0 0.0
    %195 = vmatprep.subr.mxu0 0.0
    %196 = vmatpush1.msra.mxu0 0.0
    %197 = vmatprep.subr.mxu0 0.0
    %198 = vmatpush1.msra.mxu0 0.0
    %199 = vmatprep.mubr.f32.mxu0 0.0
    %200 = vmatmul.mubr.f32.gmra.mrb[0].mxu0 %v114
    %v201 = vpop.f32.mrb[0].mxu0
    %v202 = vadd.f32 %v100, %v201
    %v203 = vpop.f32.mrb[0].mxu0
    %v204 = vadd.f32 %v100, %v203
    %205 = vmatprep.mubr.f32.mxu0 0.0
    %206 = vmatmul.mubr.f32.gmra.mrb[0].mxu0 %v117
    %v207 = vpop.f32.mrb[0].mxu0
    %v208 = vadd.f32 %v105, %v207
    %v209 = vpop.f32.mrb[0].mxu0
    %v210 = vadd.f32 %v105, %v209
    %211 = vmatprep.mubr.f32.mxu0 0.0
    %212 = vmatmul.mubr.f32.gmra.mrb[0].mxu0 %v120
    %v213 = vpop.f32.mrb[0].mxu0
    %v214 = vadd.f32 %v110, %v213
    %v215 = vpop.f32.mrb[0].mxu0
    %v216 = vadd.f32 %v110, %v215
    %217 = vdwg.mxu0
    %218 = vmatprep.subr.mxu0 %v41
    %219 = vmatpush1.msra.mxu0 %v40
    %220 = vmatprep.subr.mxu0 %v45
    %221 = vmatpush1.msra.mxu0 %v44
    %222 = vmatprep.subr.mxu0 %v49
    %223 = vmatpush1.msra.mxu0 %v48
    %224 = vmatprep.subr.mxu0 %v53
    %225 = vmatpush1.msra.mxu0 %v52
    %226 = vmatprep.subr.mxu0 %v57
    %227 = vmatpush1.msra.mxu0 %v56
    %228 = vmatprep.subr.mxu0 %v61
    %229 = vmatpush1.msra.mxu0 %v60
    %230 = vmatprep.subr.mxu0 %v65
    %231 = vmatpush1.msra.mxu0 %v64
    %232 = vmatprep.subr.mxu0 %v69
    %233 = vmatpush1.msra.mxu0 %v68
    %234 = vmatprep.subr.mxu0 %v73
    %235 = vmatpush1.msra.mxu0 %v72
    %236 = vmatprep.subr.mxu0 %v77
    %237 = vmatpush1.msra.mxu0 %v76
    %238 = vmatprep.subr.mxu0 %v81
    %239 = vmatpush1.msra.mxu0 %v80
    %240 = vmatprep.subr.mxu0 %v85
    %241 = vmatpush1.msra.mxu0 %v84
    %242 = vmatprep.subr.mxu0 %v89
    %243 = vmatpush1.msra.mxu0 %v88
    %244 = vmatprep.subr.mxu0 %v133
    %245 = vmatpush1.msra.mxu0 %v130
    %246 = vmatprep.subr.mxu0 0.0
    %247 = vmatpush1.msra.mxu0 0.0
    %248 = vmatprep.subr.mxu0 0.0
    %249 = vmatpush1.msra.mxu0 0.0
    %250 = vmatprep.subr.mxu0 0.0
    %251 = vmatpush1.msra.mxu0 0.0
    %252 = vmatprep.subr.mxu0 0.0
    %253 = vmatpush1.msra.mxu0 0.0
    %254 = vmatprep.subr.mxu0 0.0
    %255 = vmatpush1.msra.mxu0 0.0
    %256 = vmatprep.subr.mxu0 0.0
    %257 = vmatpush1.msra.mxu0 0.0
    %258 = vmatprep.subr.mxu0 0.0
    %259 = vmatpush1.msra.mxu0 0.0
    %260 = vmatprep.subr.mxu0 0.0
    %261 = vmatpush1.msra.mxu0 0.0
    %262 = vmatprep.subr.mxu0 0.0
    %263 = vmatpush1.msra.mxu0 0.0
    %264 = vmatprep.subr.mxu0 0.0
    %265 = vmatpush1.msra.mxu0 0.0
    %266 = vmatprep.subr.mxu0 0.0
    %267 = vmatpush1.msra.mxu0 0.0
    %268 = vmatprep.subr.mxu0 0.0
    %269 = vmatpush1.msra.mxu0 0.0
    %270 = vmatprep.subr.mxu0 0.0
    %271 = vmatpush1.msra.mxu0 0.0
    %272 = vmatprep.subr.mxu0 0.0
    %273 = vmatpush1.msra.mxu0 0.0
    %274 = vmatprep.subr.mxu0 0.0
    %275 = vmatpush1.msra.mxu0 0.0
    %276 = vmatprep.subr.mxu0 0.0
    %277 = vmatpush1.msra.mxu0 0.0
    %278 = vmatprep.subr.mxu0 0.0
    %279 = vmatpush1.msra.mxu0 0.0
    %280 = vmatprep.subr.mxu0 0.0
    %281 = vmatpush1.msra.mxu0 0.0
    %282 = vmatprep.mubr.f32.mxu0 0.0
    %283 = vmatmul.mubr.f32.gmra.mrb[0].mxu0 %v114
    %v284 = vpop.f32.mrb[0].mxu0
    %v285 = vadd.f32 %v100, %v284
    %v286 = vpop.f32.mrb[0].mxu0
    %v287 = vadd.f32 %v100, %v286
    %288 = vmatprep.mubr.f32.mxu0 0.0
    %289 = vmatmul.mubr.f32.gmra.mrb[0].mxu0 %v117
    %v290 = vpop.f32.mrb[0].mxu0
    %v291 = vadd.f32 %v105, %v290
    %v292 = vpop.f32.mrb[0].mxu0
    %v293 = vadd.f32 %v105, %v292
    %294 = vmatprep.mubr.f32.mxu0 0.0
    %295 = vmatmul.mubr.f32.gmra.mrb[0].mxu0 %v120
    %v296 = vpop.f32.mrb[0].mxu0
    %v297 = vadd.f32 %v110, %v296
    %v298 = vpop.f32.mrb[0].mxu0
    %v299 = vadd.f32 %v110, %v298
    %300 = vdwg.mxu0
    %v301 = vmax.f32 %v202, 0.0
    %v302 = vmax.f32 %v204, 0.0
    %v303 = vmax.f32 %v285, 0.0
    %v304 = vmax.f32 %v287, 0.0
    %v305 = vmax.f32 %v208, 0.0
    %v306 = vmax.f32 %v210, 0.0
    %v307 = vmax.f32 %v291, 0.0
    %v308 = vmax.f32 %v293, 0.0
    %v309 = vmax.f32 %v214, 0.0
    %v310 = vmax.f32 %v216, 0.0
    %v311 = vmax.f32 %v297, 0.0
    %v312 = vmax.f32 %v299, 0.0
    %v313 = vadd.f32 %v301, %v302
    %v314 = vadd.f32 %v313, %v303
    %v315 = vadd.f32 %v314, %v304
    %316 = vadd.xlane.f32.xlu0 %v315
    %v317 = vpop.xlane.xlu0 %316
    %v318 = vadd.f32 %v305, %v306
    %v319 = vadd.f32 %v318, %v307
    %v320 = vadd.f32 %v319, %v308
    %321 = vadd.xlane.f32.xlu0 %v320
    %v322 = vpop.xlane.xlu0 %321
    %v323 = vadd.f32 %v309, %v310
    %v324 = vadd.f32 %v323, %v311
    %v325 = vadd.f32 %v324, %v312
    %326 = vadd.xlane.f32.xlu0 %v325
    %v327 = vpop.xlane.xlu0 %326
    %v328 = vmul.f32 %v301, %v301
    %v329 = vmul.f32 %v302, %v302
    %v330 = vmul.f32 %v303, %v303
    %v331 = vmul.f32 %v304, %v304
    %v332 = vmul.f32 %v305, %v305
    %v333 = vmul.f32 %v306, %v306
    %v334 = vmul.f32 %v307, %v307
    %v335 = vmul.f32 %v308, %v308
    %v336 = vmul.f32 %v309, %v309
    %v337 = vmul.f32 %v310, %v310
    %v338 = vmul.f32 %v311, %v311
    %v339 = vmul.f32 %v312, %v312
    %v340 = vadd.f32 %v328, %v329
    %v341 = vadd.f32 %v340, %v330
    %v342 = vadd.f32 %v341, %v331
    %343 = vadd.xlane.f32.xlu0 %v342
    %v344 = vpop.xlane.xlu0 %343
    %v345 = vadd.f32 %v332, %v333
    %v346 = vadd.f32 %v345, %v334
    %v347 = vadd.f32 %v346, %v335
    %348 = vadd.xlane.f32.xlu0 %v347
    %v349 = vpop.xlane.xlu0 %348
    %v350 = vadd.f32 %v336, %v337
    %v351 = vadd.f32 %v350, %v338
    %v352 = vadd.f32 %v351, %v339
    %353 = vadd.xlane.f32.xlu0 %v352
    %v354 = vpop.xlane.xlu0 %353
    %v355 = vmul.f32 %v317, 0.001953125
    %v356 = vmul.f32 %v322, 0.001953125
    %v357 = vmul.f32 %v327, 0.001953125
    %v358 = vmul.f32 %v344, 0.001953125
    %v359 = vmul.f32 %v349, 0.001953125
    %v360 = vmul.f32 %v354, 0.001953125
    %v361 = vmul.f32 %v355, %v355
    %v362 = vmul.f32 %v356, %v356
    %v363 = vmul.f32 %v357, %v357
    %v364 = vsub.f32 %v358, %v361
    %v365 = vsub.f32 %v359, %v362
    %v366 = vsub.f32 %v360, %v363
    %v367 = vsub.f32 %v301, %v355
    %v368 = vsub.f32 %v302, %v355
    %v369 = vsub.f32 %v303, %v355
    %v370 = vsub.f32 %v304, %v355
    %v371 = vsub.f32 %v305, %v356
    %v372 = vsub.f32 %v306, %v356
    %v373 = vsub.f32 %v307, %v356
    %v374 = vsub.f32 %v308, %v356
    %v375 = vsub.f32 %v309, %v357
    %v376 = vsub.f32 %v310, %v357
    %v377 = vsub.f32 %v311, %v357
    %v378 = vsub.f32 %v312, %v357
    %v379 = vadd.f32 %v364, 1e-05
    %v380 = vadd.f32 %v365, 1e-05
    %v381 = vadd.f32 %v366, 1e-05
    %v382 = vrsqrt.pop %v379
    %v383 = vrsqrt.pop %v380
    %v384 = vrsqrt.pop %v381
    %v385 = vmul.f32 %v367, %v382
    %v386 = vmul.f32 %v368, %v382
    %v387 = vmul.f32 %v369, %v382
    %v388 = vmul.f32 %v370, %v382
    %v389 = vmul.f32 %v371, %v383
    %v390 = vmul.f32 %v372, %v383
    %v391 = vmul.f32 %v373, %v383
    %v392 = vmul.f32 %v374, %v383
    %v393 = vmul.f32 %v375, %v384
    %v394 = vmul.f32 %v376, %v384
    %v395 = vmul.f32 %v377, %v384
    %v396 = vmul.f32 %v378, %v384
    %v397 = vld [vmem:[%s3] sm:$0xff]
    %v398 = vld [vmem:[%s4] sm:$0xff]
    %400 = vset.pattern.permute.xlu0 0
    %401 = vperm.xlu0 %400, %v398
    %v402 = vpop.permute.xlu0 %401
    %vm404 = vcmask 195584
    %v406 = vsel %vm404, %v397, 0
    %408 = vmatprep.subr.mxu0 %v386
    %409 = vmatpush1.msra.mxu0 %v385
    %410 = vmatprep.subr.mxu0 %v390
    %411 = vmatpush1.msra.mxu0 %v389
    %412 = vmatprep.subr.mxu0 %v394
    %413 = vmatpush1.msra.mxu0 %v393
    %414 = vmatprep.subr.mxu0 0.0
    %415 = vmatpush1.msra.mxu0 0.0
    %416 = vmatprep.subr.mxu0 0.0
    %417 = vmatpush1.msra.mxu0 0.0
    %418 = vmatprep.subr.mxu0 0.0
    %419 = vmatpush1.msra.mxu0 0.0
    %420 = vmatprep.subr.mxu0 0.0
    %421 = vmatpush1.msra.mxu0 0.0
    %422 = vmatprep.subr.mxu0 0.0
    %423 = vmatpush1.msra.mxu0 0.0
    %424 = vmatprep.subr.mxu0 0.0
    %425 = vmatpush1.msra.mxu0 0.0
    %426 = vmatprep.subr.mxu0 0.0
    %427 = vmatpush1.msra.mxu0 0.0
    %428 = vmatprep.subr.mxu0 0.0
    %429 = vmatpush1.msra.mxu0 0.0
    %430 = vmatprep.subr.mxu0 0.0
    %431 = vmatpush1.msra.mxu0 0.0
    %432 = vmatprep.subr.mxu0 0.0
    %433 = vmatpush1.msra.mxu0 0.0
    %434 = vmatprep.subr.mxu0 0.0
    %435 = vmatpush1.msra.mxu0 0.0
    %436 = vmatprep.subr.mxu0 0.0
    %437 = vmatpush1.msra.mxu0 0.0
    %438 = vmatprep.subr.mxu0 0.0
    %439 = vmatpush1.msra.mxu0 0.0
    %440 = vmatprep.subr.mxu0 0.0
    %441 = vmatpush1.msra.mxu0 0.0
    %442 = vmatprep.subr.mxu0 0.0
    %443 = vmatpush1.msra.mxu0 0.0
    %444 = vmatprep.subr.mxu0 0.0
    %445 = vmatpush1.msra.mxu0 0.0
    %446 = vmatprep.subr.mxu0 0.0
    %447 = vmatpush1.msra.mxu0 0.0
    %448 = vmatprep.subr.mxu0 0.0
    %449 = vmatpush1.msra.mxu0 0.0
    %450 = vmatprep.subr.mxu0 0.0
    %451 = vmatpush1.msra.mxu0 0.0
    %452 = vmatprep.subr.mxu0 0.0
    %453 = vmatpush1.msra.mxu0 0.0
    %454 = vmatprep.subr.mxu0 0.0
    %455 = vmatpush1.msra.mxu0 0.0
    %456 = vmatprep.subr.mxu0 0.0
    %457 = vmatpush1.msra.mxu0 0.0
    %458 = vmatprep.subr.mxu0 0.0
    %459 = vmatpush1.msra.mxu0 0.0
    %460 = vmatprep.subr.mxu0 0.0
    %461 = vmatpush1.msra.mxu0 0.0
    %462 = vmatprep.subr.mxu0 0.0
    %463 = vmatpush1.msra.mxu0 0.0
    %464 = vmatprep.subr.mxu0 0.0
    %465 = vmatpush1.msra.mxu0 0.0
    %466 = vmatprep.subr.mxu0 0.0
    %467 = vmatpush1.msra.mxu0 0.0
    %468 = vmatprep.subr.mxu0 0.0
    %469 = vmatpush1.msra.mxu0 0.0
    %470 = vmatprep.subr.mxu0 0.0
    %471 = vmatpush1.msra.mxu0 0.0
    %472 = vmatprep.mubr.f32.mxu0 0.0
    %473 = vmatmul.mubr.f32.gmra.mrb[0].mxu0 %v406
    %v474 = vpop.f32.mrb[0].mxu0
    %v475 = vadd.f32 %v402, %v474
    %v476 = vpop.f32.mrb[0].mxu0
    %v477 = vadd.f32 %v402, %v476
    %478 = vdwg.mxu0
    %479 = vmatprep.subr.mxu0 %v388
    %480 = vmatpush1.msra.mxu0 %v387
    %481 = vmatprep.subr.mxu0 %v392
    %482 = vmatpush1.msra.mxu0 %v391
    %483 = vmatprep.subr.mxu0 %v396
    %484 = vmatpush1.msra.mxu0 %v395
    %485 = vmatprep.subr.mxu0 0.0
    %486 = vmatpush1.msra.mxu0 0.0
    %487 = vmatprep.subr.mxu0 0.0
    %488 = vmatpush1.msra.mxu0 0.0
    %489 = vmatprep.subr.mxu0 0.0
    %490 = vmatpush1.msra.mxu0 0.0
    %491 = vmatprep.subr.mxu0 0.0
    %492 = vmatpush1.msra.mxu0 0.0
    %493 = vmatprep.subr.mxu0 0.0
    %494 = vmatpush1.msra.mxu0 0.0
    %495 = vmatprep.subr.mxu0 0.0
    %496 = vmatpush1.msra.mxu0 0.0
    %497 = vmatprep.subr.mxu0 0.0
    %498 = vmatpush1.msra.mxu0 0.0
    %499 = vmatprep.subr.mxu0 0.0
    %500 = vmatpush1.msra.mxu0 0.0
    %501 = vmatprep.subr.mxu0 0.0
    %502 = vmatpush1.msra.mxu0 0.0
    %503 = vmatprep.subr.mxu0 0.0
    %504 = vmatpush1.msra.mxu0 0.0
    %505 = vmatprep.subr.mxu0 0.0
    %506 = vmatpush1.msra.mxu0 0.0
    %507 = vmatprep.subr.mxu0 0.0
    %508 = vmatpush1.msra.mxu0 0.0
    %509 = vmatprep.subr.mxu0 0.0
    %510 = vmatpush1.msra.mxu0 0.0
    %511 = vmatprep.subr.mxu0 0.0
    %512 = vmatpush1.msra.mxu0 0.0
    %513 = vmatprep.subr.mxu0 0.0
    %514 = vmatpush1.msra.mxu0 0.0
    %515 = vmatprep.subr.mxu0 0.0
    %516 = vmatpush1.msra.mxu0 0.0
    %517 = vmatprep.subr.mxu0 0.0
    %518 = vmatpush1.msra.mxu0 0.0
    %519 = vmatprep.subr.mxu0 0.0
    %520 = vmatpush1.msra.mxu0 0.0
    %521 = vmatprep.subr.mxu0 0.0
    %522 = vmatpush1.msra.mxu0 0.0
    %523 = vmatprep.subr.mxu0 0.0
    %524 = vmatpush1.msra.mxu0 0.0
    %525 = vmatprep.subr.mxu0 0.0
    %526 = vmatpush1.msra.mxu0 0.0
    %527 = vmatprep.subr.mxu0 0.0
    %528 = vmatpush1.msra.mxu0 0.0
    %529 = vmatprep.subr.mxu0 0.0
    %530 = vmatpush1.msra.mxu0 0.0
    %531 = vmatprep.subr.mxu0 0.0
    %532 = vmatpush1.msra.mxu0 0.0
    %533 = vmatprep.subr.mxu0 0.0
    %534 = vmatpush1.msra.mxu0 0.0
    %535 = vmatprep.subr.mxu0 0.0
    %536 = vmatpush1.msra.mxu0 0.0
    %537 = vmatprep.subr.mxu0 0.0
    %538 = vmatpush1.msra.mxu0 0.0
    %539 = vmatprep.subr.mxu0 0.0
    %540 = vmatpush1.msra.mxu0 0.0
    %541 = vmatprep.subr.mxu0 0.0
    %542 = vmatpush1.msra.mxu0 0.0
    %543 = vmatprep.mubr.f32.mxu0 0.0
    %544 = vmatmul.mubr.f32.gmra.mrb[0].mxu0 %v406
    %v545 = vpop.f32.mrb[0].mxu0
    %v546 = vadd.f32 %v402, %v545
    %v547 = vpop.f32.mrb[0].mxu0
    %v548 = vadd.f32 %v402, %v547
    %549 = vdwg.mxu0
    %550 = vst [vmem:[#allocation5] sm:$0xff] %v475
    %551 = vst [vmem:[#allocation5 + $0x8] sm:$0xff] %v477
    %552 = vst [vmem:[#allocation5 + $0x10] sm:$0xff] %v546
    %553 = vst [vmem:[#allocation5 + $0x18] sm:$0xff] %v548
    // Predicated region
    $region26: #{tpu_custom_call.1} parent=1 // pred_check
      _
    $region27: #{tpu_custom_call.1} parent=1 // pred_check_branch
      %555 = sbr.rel (0) target = $region29
    $region28: #{tpu_custom_call.1} parent=1 // pred_region
      %s557 = ssub.s32 512, 512
      %558 = vsyncadd [#allocation4], %s557
      %s560 = sshll.u32 [#allocation5], 4
      %s561 = int_to_ptr.vmem [resolvable:$true] %s560
      %563 = dma.vmem_to_hbm [thread:$0]  %s561, 512, %s5, [#allocation4]
    $region29: #{tpu_custom_call.1} parent=1 // pred_fallthru
      _
    // Predicated region
    $region30: #{tpu_custom_call.1} parent=1 // pred_check
      _
    $region31: #{tpu_custom_call.1} parent=1 // pred_check_branch
      %565 = sbr.rel (0) target = $region33
    $region32: #{tpu_custom_call.1} parent=1 // pred_region
      %566 = dma.done [#allocation4], 512
    $region33: #{tpu_custom_call.1} parent=1 // pred_fallthru
      _
    %567 = vsyncpa [#allocation3], 1
    %568 = vsyncpa [#allocation4], 1

</llo_original>
